<compile_context>
chip_gen: v6e
topology: v6e:2x2x1
jax: 0.10.0
libtpu: 0.0.40
codegen_flags: <defaults>
</compile_context>

<pallas_src>
import functools

import jax
import jax.numpy as jnp
from jax.experimental import pallas as pl
from jax.experimental.pallas import tpu as pltpu

BN_EPS = 1e-5


def _round_up(x, m):
    return (x + m - 1) // m * m


def _tensorcores_per_chip():
    """Megacore detection: only v4/v5p/v7x have 2 TensorCores per chip."""
    try:
        kind = jax.devices()[0].device_kind.lower()
    except Exception:
        return 1
    if "v4" in kind or "v5p" in kind or "v7" in kind:
        return 2
    return 1


def fel_kernel(x_ref, w1_ref, wa1_ref, wa2_ref, vecs_ref, o_ref, *, c_out, c_hid_p):
    bt, hw, c_in = x_ref.shape
    cp = w1_ref.shape[-1]                                   # lane-padded Cout

    x = x_ref[...]                                          # (Bt, HW, Cin) bf16

    b1 = vecs_ref[0:1, :]                                   # (1, Cp)     BN-folded conv bias
    ba2 = vecs_ref[1:2, :]                                  # (1, Cp)     SE conv2 bias
    ba1 = vecs_ref[2:3, :c_hid_p]                           # (1, Chid_p) SE conv1 bias (128-aligned)

    # 1x1 conv (+ folded BatchNorm) == channel matmul on the MXU, bf16 in / f32 acc.
    # (reshape is a free view when bt*hw is a multiple of 8 — the wrapper keeps HW=H*W
    #  a multiple of 8 in the demo shapes.)
    y = jnp.dot(x.reshape(bt * hw, c_in), w1_ref[...],
                preferred_element_type=jnp.float32) + b1    # (Bt*HW, Cp)
    y = y.reshape(bt, hw, cp)

    # Squeeze-excite: GAP -> 1x1 conv -> ReLU -> 1x1 conv -> sigmoid (M = Bt).
    # Padded Cp/Chid_p lanes carry exact zeros (zero-padded weights/biases), so
    # they contribute nothing to either matmul.
    pooled = jnp.mean(y, axis=1)                            # (Bt, Cp) f32
    h = jnp.maximum(
        jnp.dot(pooled.astype(jnp.bfloat16), wa1_ref[...],
                preferred_element_type=jnp.float32) + ba1, 0.0)          # (Bt, Chid_p)
    attn = jax.nn.sigmoid(
        jnp.dot(h.astype(jnp.bfloat16), wa2_ref[...],
                preferred_element_type=jnp.float32) + ba2)               # (Bt, Cp)

    # Drop padded lanes before the elementwise tail; the output is stored
    # UNPADDED so no post-call slice copy of the whole output is needed.
    if cp > c_out:
        y = y[:, :, :c_out]
        attn = attn[:, :c_out]

    out = jnp.maximum(y * attn[:, None, :], 0.0)            # ReLU(y * attn)
    out = out + x[:, :, :c_out].astype(jnp.float32)         # residual on first Cout input channels
    o_ref[...] = out.astype(o_ref.dtype)


def fel_forward_nhwc(x_nhwc, params, *, out_dtype=jnp.bfloat16):
    """x_nhwc: (N, H, W, Cin) -> (N, H, W, Cout), channels-last throughout."""
    N, H, W, C_in = x_nhwc.shape
    C_in_w, C_out = params["w1"].shape
    C_hid = params["wa1"].shape[1]
    assert C_in == C_in_w and C_in >= C_out, (C_in, C_out)
    HW = H * W
    Cp = _round_up(C_out, 128)                              # lane-padded matmul width
    Chid_p = _round_up(C_hid, 128)                          # lane-dense SE hidden (<= Cp)

    # ---- trace-time parameter prep (tiny arrays, folded by XLA) -------------
    scale = params["gamma"] * jax.lax.rsqrt(params["var"] + BN_EPS)      # (1, Cout)
    w1 = (params["w1"] * scale).astype(jnp.bfloat16)                     # (Cin, Cout)
    b1 = (params["b1"] - params["mean"]) * scale + params["beta"]        # (1, Cout)

    w1 = jnp.pad(w1, ((0, 0), (0, Cp - C_out)))                          # zero extra cols
    b1 = jnp.pad(b1, ((0, 0), (0, Cp - C_out)))
    ba2 = jnp.pad(params["ba2"], ((0, 0), (0, Cp - C_out)))
    wa1 = jnp.pad(params["wa1"],
                  ((0, Cp - C_out), (0, Chid_p - C_hid))).astype(jnp.bfloat16)   # (Cp, Chid_p)
    wa2 = jnp.pad(params["wa2"],
                  ((0, Chid_p - C_hid), (0, Cp - C_out))).astype(jnp.bfloat16)   # (Chid_p, Cp)
    ba1 = jnp.pad(params["ba1"], ((0, 0), (0, Cp - C_hid)))                      # (1, Cp)
    vecs = jnp.concatenate([b1, ba2, ba1], axis=0).astype(jnp.float32)           # (3, Cp)

    x = x_nhwc.reshape(N, HW, C_in).astype(jnp.bfloat16)
    out_bytes = jnp.dtype(out_dtype).itemsize

    # ---- batch tile: ~512 matmul rows, VMEM-budgeted, megacore-aware --------
    cores = _tensorcores_per_chip()
    per_b = 2 * HW * (C_in * 2 + C_out * out_bytes)   # double-buffered x + out, per batch row
    vmem_block_budget = 20 << 20                      # fits under every gen's 32 MiB scoped default
    bt_vmem = max(1, vmem_block_budget // max(per_b, 1))
    bt_rows = max(1, pl.cdiv(512, max(HW, 1)))        # target >= 512 rows for the main matmul
    bt = int(min(N, bt_rows, bt_vmem))
    if cores > 1:
        # Megacore (v4/v5p/v7x) only: keep >= `cores` parallel grid steps.
        while bt > 1 and pl.cdiv(N, bt) < cores:
            bt = max(1, bt // 2)
    grid = (pl.cdiv(N, bt),)                          # remainder tile handled by Pallas masking

    weight_bytes = (C_in * Cp + Cp * Chid_p + Chid_p * Cp) * 2 + 3 * Cp * 4
    vmem_limit = int(min(max(bt * per_b + 2 * weight_bytes + (4 << 20), 16 << 20), 64 << 20))

    def full(shape):
        return pl.BlockSpec(shape, lambda n, _s=shape: tuple(0 for _ in _s))

    kernel = functools.partial(fel_kernel, c_out=C_out, c_hid_p=Chid_p)
    out = pl.pallas_call(
        kernel,
        out_shape=jax.ShapeDtypeStruct((N, HW, C_out), out_dtype),
        grid=grid,
        in_specs=[
            pl.BlockSpec((bt, HW, C_in), lambda n: (n, 0, 0)),   # x (+ residual), bf16
            full((C_in, Cp)),                                    # conv+BN weight, bf16
            full((Cp, Chid_p)),                                  # SE conv1 weight, bf16
            full((Chid_p, Cp)),                                  # SE conv2 weight, bf16
            full((3, Cp)),                                       # packed bias vectors, f32
        ],
        out_specs=pl.BlockSpec((bt, HW, C_out), lambda n: (n, 0, 0)),  # unpadded output
        compiler_params=pltpu.CompilerParams(
            dimension_semantics=("parallel",),
            vmem_limit_bytes=vmem_limit),
    )(x, w1, wa1, wa2, vecs)

    return out.reshape(N, H, W, C_out)


def fel_forward_nchw(x_nchw, params, **kw):
    # Optional adapter for NCHW callers; prefer keeping the whole pipeline
    # channels-last so this transpose (an extra HBM read+write) never runs.
    out = fel_forward_nhwc(jnp.transpose(x_nchw, (0, 2, 3, 1)), params, **kw)
    return jnp.transpose(out, (0, 3, 1, 2))


def fel_reference_nhwc(x_nhwc, params):
    """Pure-JAX reference of the PyTorch forward (eval-mode BN), channels-last."""
    x = x_nhwc.astype(jnp.float32)
    C_out = params["w1"].shape[1]
    y = jnp.einsum("nhwc,cd->nhwd", x, params["w1"]) + params["b1"][0]
    inv_std = jax.lax.rsqrt(params["var"][0] + BN_EPS)
    y = (y - params["mean"][0]) * inv_std * params["gamma"][0] + params["beta"][0]
    pooled = jnp.mean(y, axis=(1, 2))                              # (N, Cout)
    h = jnp.maximum(pooled @ params["wa1"] + params["ba1"], 0.0)
    a = jax.nn.sigmoid(h @ params["wa2"] + params["ba2"])          # (N, Cout)
    out = jnp.maximum(y * a[:, None, None, :], 0.0)
    return out + x[..., :C_out]


def make_params(key, c_in, c_out):
    c_hid = c_out // 16
    ks = jax.random.split(key, 8)
    return {
        # Conv2d(c_in, c_out, 1): torch weight (Cout, Cin, 1, 1) stored as (Cin, Cout).
        "w1":    jax.random.normal(ks[0], (c_in, c_out), jnp.float32) * 0.05,
        "b1":    jax.random.normal(ks[1], (1, c_out), jnp.float32) * 0.05,
        # BatchNorm2d(c_out) — eval mode (running stats).
        "gamma": 1.0 + 0.1 * jax.random.normal(ks[2], (1, c_out), jnp.float32),
        "beta":  0.1 * jax.random.normal(ks[3], (1, c_out), jnp.float32),
        "mean":  0.1 * jax.random.normal(ks[4], (1, c_out), jnp.float32),
        "var":   1.0 + 0.1 * jax.random.uniform(ks[5], (1, c_out), jnp.float32),
        # SE attention 1x1 convs stored as matmul weights.
        "wa1":   jax.random.normal(ks[6], (c_out, c_hid), jnp.float32) * 0.2,
        "ba1":   jnp.zeros((1, c_hid), jnp.float32),
        "wa2":   jax.random.normal(ks[7], (c_hid, c_out), jnp.float32) * 0.2,
        "ba2":   jnp.zeros((1, c_out), jnp.float32),
    }


if __name__ == "__main__":
    # Small shapes consistent with the module (in_channels >= out_channels so the
    # residual channel-slice branch is exercised; out_channels // 16 >= 1;
    # Cout=128 matches the module default and keeps stores lane-dense; HW=64 is
    # a multiple of 8 so in-kernel reshapes are free views).
    N, C_IN, C_OUT, H, W = 4, 256, 128, 8, 8

    key = jax.random.PRNGKey(0)
    kx, kp = jax.random.split(key)
    x = jax.random.normal(kx, (N, H, W, C_IN), jnp.float32)     # channels-last input
    params = make_params(kp, C_IN, C_OUT)

    out = fel_forward_nhwc(x, params)                           # bf16 output by default
    out = jax.block_until_ready(out)

    ref = fel_reference_nhwc(x, params)
    assert out.shape == (N, H, W, C_OUT), out.shape
    assert out.dtype == jnp.bfloat16, out.dtype
    # bf16 x/w1 on the MXU path + bf16 output storage introduce small numeric
    # drift vs the f32 reference (the residual is also added from the bf16 copy
    # of x — accepted precision deviation on the skip path).
    err = float(jnp.max(jnp.abs(out.astype(jnp.float32) - ref)))
    assert err < 6e-2, err

    print("KERNEL_OK")
</pallas_src>

<mosaic_0001>
module attributes {stable_mosaic.version = 11 : i64} {
  func.func @fel_kernel(%arg0: i32, %arg1: memref<4x64x256xbf16, #tpu.memory_space<vmem>>, %arg2: memref<256x128xbf16, #tpu.memory_space<vmem>>, %arg3: memref<128x128xbf16, #tpu.memory_space<vmem>>, %arg4: memref<128x128xbf16, #tpu.memory_space<vmem>>, %arg5: memref<3x128xf32, #tpu.memory_space<vmem>>, %arg6: memref<4x64x128xbf16, #tpu.memory_space<vmem>>) attributes {dimension_semantics = [#tpu.dimension_semantics<parallel>], iteration_bounds = array<i64: 1>, scalar_prefetch = 0 : i64, scratch_operands = 0 : i64, tpu.core_type = #tpu.core_type<tc>, window_params = [{transform_indices = @transform_0, window_bounds = array<i64: 4, 64, 256>}, {pipeline_mode = #tpu.pipeline_mode<synchronous>, transform_indices = @transform_1, window_bounds = array<i64: 256, 128>}, {pipeline_mode = #tpu.pipeline_mode<synchronous>, transform_indices = @transform_2, window_bounds = array<i64: 128, 128>}, {pipeline_mode = #tpu.pipeline_mode<synchronous>, transform_indices = @transform_3, window_bounds = array<i64: 128, 128>}, {pipeline_mode = #tpu.pipeline_mode<synchronous>, transform_indices = @transform_4, window_bounds = array<i64: 3, 128>}, {transform_indices = @transform_5, window_bounds = array<i64: 4, 64, 128>}]} {
    %c0 = arith.constant 0 : index
    %c0_0 = arith.constant 0 : index
    %c0_1 = arith.constant 0 : index
    %0 = vector.load %arg1[%c0, %c0_0, %c0_1] : memref<4x64x256xbf16, #tpu.memory_space<vmem>>, vector<4x64x256xbf16>
    %c0_2 = arith.constant 0 : index
    %c0_3 = arith.constant 0 : index
    %1 = vector.load %arg5[%c0_2, %c0_3] : memref<3x128xf32, #tpu.memory_space<vmem>>, vector<1x128xf32>
    %c1 = arith.constant 1 : index
    %c0_4 = arith.constant 0 : index
    %2 = vector.load %arg5[%c1, %c0_4] : memref<3x128xf32, #tpu.memory_space<vmem>>, vector<1x128xf32>
    %c2 = arith.constant 2 : index
    %c0_5 = arith.constant 0 : index
    %3 = vector.load %arg5[%c2, %c0_5] : memref<3x128xf32, #tpu.memory_space<vmem>>, vector<1x128xf32>
    %4 = vector.shape_cast %0 : vector<4x64x256xbf16> to vector<256x256xbf16>
    %c0_6 = arith.constant 0 : index
    %c0_7 = arith.constant 0 : index
    %5 = vector.load %arg2[%c0_6, %c0_7] : memref<256x128xbf16, #tpu.memory_space<vmem>>, vector<256x128xbf16>
    %cst = arith.constant dense<0.000000e+00> : vector<256x128xf32>
    %6 = tpu.matmul %4, %5, %cst {dimension_numbers = #tpu.dot_dimension_numbers<[1], [0], [0], [1], [0, 0, 1, 1], [], []>} : vector<256x256xbf16>, vector<256x128xbf16>, vector<256x128xf32> -> vector<256x128xf32>
    %7 = vector.broadcast %1 : vector<1x128xf32> to vector<256x128xf32>
    %8 = arith.addf %6, %7 : vector<256x128xf32>
    %9 = vector.shape_cast %8 : vector<256x128xf32> to vector<4x64x128xf32>
    %cst_8 = arith.constant dense<0.000000e+00> : vector<4x128xf32>
    %10 = vector.multi_reduction <add>, %9, %cst_8 [1] : vector<4x64x128xf32> to vector<4x128xf32>
    %cst_9 = arith.constant 6.400000e+01 : f32
    %11 = vector.broadcast %cst_9 : f32 to vector<4x128xf32>
    %12 = arith.divf %10, %11 : vector<4x128xf32>
    %13 = arith.truncf %12 : vector<4x128xf32> to vector<4x128xbf16>
    %c0_10 = arith.constant 0 : index
    %c0_11 = arith.constant 0 : index
    %14 = vector.load %arg3[%c0_10, %c0_11] : memref<128x128xbf16, #tpu.memory_space<vmem>>, vector<128x128xbf16>
    %cst_12 = arith.constant dense<0.000000e+00> : vector<4x128xf32>
    %15 = tpu.matmul %13, %14, %cst_12 {dimension_numbers = #tpu.dot_dimension_numbers<[1], [0], [0], [1], [0, 0, 1, 1], [], []>} : vector<4x128xbf16>, vector<128x128xbf16>, vector<4x128xf32> -> vector<4x128xf32>
    %16 = vector.broadcast %3 : vector<1x128xf32> to vector<4x128xf32>
    %17 = arith.addf %15, %16 : vector<4x128xf32>
    %cst_13 = arith.constant 0.000000e+00 : f32
    %18 = vector.broadcast %cst_13 : f32 to vector<4x128xf32>
    %19 = arith.maximumf %17, %18 : vector<4x128xf32>
    %20 = arith.truncf %19 : vector<4x128xf32> to vector<4x128xbf16>
    %c0_14 = arith.constant 0 : index
    %c0_15 = arith.constant 0 : index
    %21 = vector.load %arg4[%c0_14, %c0_15] : memref<128x128xbf16, #tpu.memory_space<vmem>>, vector<128x128xbf16>
    %cst_16 = arith.constant dense<0.000000e+00> : vector<4x128xf32>
    %22 = tpu.matmul %20, %21, %cst_16 {dimension_numbers = #tpu.dot_dimension_numbers<[1], [0], [0], [1], [0, 0, 1, 1], [], []>} : vector<4x128xbf16>, vector<128x128xbf16>, vector<4x128xf32> -> vector<4x128xf32>
    %23 = vector.broadcast %2 : vector<1x128xf32> to vector<4x128xf32>
    %24 = arith.addf %22, %23 : vector<4x128xf32>
    %25 = arith.negf %24 : vector<4x128xf32>
    %26 = math.exp %25 : vector<4x128xf32>
    %cst_17 = arith.constant 1.000000e+00 : f32
    %27 = vector.broadcast %cst_17 : f32 to vector<4x128xf32>
    %28 = arith.addf %27, %26 : vector<4x128xf32>
    %29 = arith.divf %27, %28 : vector<4x128xf32>
    %30 = vector.shape_cast %29 : vector<4x128xf32> to vector<4x1x128xf32>
    %31 = vector.broadcast %30 : vector<4x1x128xf32> to vector<4x64x128xf32>
    %32 = arith.mulf %9, %31 : vector<4x64x128xf32>
    %cst_18 = arith.constant 0.000000e+00 : f32
    %33 = vector.broadcast %cst_18 : f32 to vector<4x64x128xf32>
    %34 = arith.maximumf %32, %33 : vector<4x64x128xf32>
    %35 = vector.extract_strided_slice %0 {offsets = [0, 0, 0], sizes = [4, 64, 128], strides = [1, 1, 1]} : vector<4x64x256xbf16> to vector<4x64x128xbf16>
    %36 = arith.extf %35 : vector<4x64x128xbf16> to vector<4x64x128xf32>
    %37 = arith.addf %34, %36 : vector<4x64x128xf32>
    %38 = arith.truncf %37 : vector<4x64x128xf32> to vector<4x64x128xbf16>
    %c0_19 = arith.constant 0 : index
    %c0_20 = arith.constant 0 : index
    %c0_21 = arith.constant 0 : index
    %39 = vector.load %arg6[%c0_19, %c0_20, %c0_21] : memref<4x64x128xbf16, #tpu.memory_space<vmem>>, vector<4x64x128xbf16>
    tpu.vector_store %arg6[%c0_19, %c0_20, %c0_21], %38 {strides = array<i32>} : memref<4x64x128xbf16, #tpu.memory_space<vmem>>, vector<4x64x128xbf16>,
    return
  }
  func.func @transform_0(%arg0: i32) -> (i32, i32, i32) {
    %c0_i32 = arith.constant 0 : i32
    %c0_i32_0 = arith.constant 0 : i32
    %c0_i32_1 = arith.constant 0 : i32
    return %arg0, %c0_i32, %c0_i32_0 : i32, i32, i32
  }
  func.func @transform_1(%arg0: i32) -> (i32, i32) {
    %c0_i32 = arith.constant 0 : i32
    %c0_i32_0 = arith.constant 0 : i32
    %c0_i32_1 = arith.constant 0 : i32
    return %c0_i32, %c0_i32_0 : i32, i32
  }
  func.func @transform_2(%arg0: i32) -> (i32, i32) {
    %c0_i32 = arith.constant 0 : i32
    %c0_i32_0 = arith.constant 0 : i32
    %c0_i32_1 = arith.constant 0 : i32
    return %c0_i32, %c0_i32_0 : i32, i32
  }
  func.func @transform_3(%arg0: i32) -> (i32, i32) {
    %c0_i32 = arith.constant 0 : i32
    %c0_i32_0 = arith.constant 0 : i32
    %c0_i32_1 = arith.constant 0 : i32
    return %c0_i32, %c0_i32_0 : i32, i32
  }
  func.func @transform_4(%arg0: i32) -> (i32, i32) {
    %c0_i32 = arith.constant 0 : i32
    %c0_i32_0 = arith.constant 0 : i32
    %c0_i32_1 = arith.constant 0 : i32
    return %c0_i32, %c0_i32_0 : i32, i32
  }
  func.func @transform_5(%arg0: i32) -> (i32, i32, i32) {
    %c0_i32 = arith.constant 0 : i32
    %c0_i32_0 = arith.constant 0 : i32
    %c0_i32_1 = arith.constant 0 : i32
    return %arg0, %c0_i32, %c0_i32_0 : i32, i32, i32
  }
}

</mosaic_0001>

<llo_original>
// kernel: tpu_custom_call.1
$region0: #{tpu_custom_call.1}
  #allocation0 [shape = 'u32[]', space=smem, size = 0x4, offset = 0x4, fixed_abs, tag = 'smem constant byte address 0x4 - core index']
  #allocation1 [shape = 'u32[144,128]{1,0:T(1,128)}', space=vmem, size = 0x12000, scoped, tag = 'internal scratch']
  %s0 = inlined_call_operand.hbm [shape: bf16[4,64,256], index: 0, kind: input, shape index: {}]
  %s1 = inlined_call_operand.hbm [shape: bf16[256,128], index: 1, kind: input, shape index: {}]
  %s2 = inlined_call_operand.hbm [shape: bf16[128,128], index: 2, kind: input, shape index: {}]
  %s3 = inlined_call_operand.hbm [shape: bf16[128,128], index: 3, kind: input, shape index: {}]
  %s4 = inlined_call_operand.vmem [shape: f32[3,128], index: 4, kind: input, shape index: {}]
  %s5 = inlined_call_operand.hbm [shape: bf16[4,64,128], index: 5, kind: output, shape index: {}]
  %s6 = sld [smem:[#allocation0]]
  $region46: #{tpu_custom_call.1} parent=0
    _
  %s8 = ssub.s32 1, %s6
  %s9 = scalar_select 0, %s8, %s6
  $region1: #{tpu_custom_call.1} parent=0
    #allocation2 [shape = 'u8[131072]{0}', space=vmem, size = 0x20000, scoped, tag = 'input window, operand 0, single buffered']
    #allocation3 [shape = 's32[1]{0}', space=sflag, size = 0x4, scoped, tag = 'scoped memory for tpu_custom_call.1']
    #allocation4 [shape = 's32[1]{0}', space=sflag, size = 0x4, scoped, tag = 'scoped memory for tpu_custom_call.1']
    #allocation5 [shape = 'u8[65536]{0}', space=vmem, size = 0x10000, scoped, tag = 'input window, operand 1, single buffered']
    #allocation6 [shape = 's32[1]{0}', space=sflag, size = 0x4, scoped, tag = 'scoped memory for tpu_custom_call.1']
    #allocation7 [shape = 'u8[32768]{0}', space=vmem, size = 0x8000, scoped, tag = 'input window, operand 2, single buffered']
    #allocation8 [shape = 'u8[32768]{0}', space=vmem, size = 0x8000, scoped, tag = 'input window, operand 3, single buffered']
    #allocation9 [shape = 's32[1]{0}', space=sflag, size = 0x4, scoped, tag = 'scoped memory for tpu_custom_call.1']
    #allocation10 [shape = 'u8[65536]{0}', space=vmem, size = 0x10000, scoped, tag = 'output window, operand 0, single buffered']
    %10 = vsyncpa [#allocation3], 0
    %11 = vsyncpa [#allocation6], 0
    %12 = vsyncpa [#allocation9], 0
    %13 = vsyncpa [#allocation4], 0
    // Predicated region
    $region2: #{tpu_custom_call.1} parent=1 // pred_check
      _
    $region3: #{tpu_custom_call.1} parent=1 // pred_check_branch
      %15 = sbr.rel (0) target = $region5
    $region4: #{tpu_custom_call.1} parent=1 // pred_region
      %s17 = ssub.s32 4096, 4096
      %18 = vsyncadd [#allocation3], %s17
      %s19 = sshll.u32 [#allocation2], 4
      %s20 = int_to_ptr.vmem [resolvable:$true] %s19
      %25 = dma.hbm_to_vmem [thread:$0]  %s0, 4096, %s20, [#allocation3], 128, 128, 8
    $region5: #{tpu_custom_call.1} parent=1 // pred_fallthru
      _
    // Predicated region
    $region6: #{tpu_custom_call.1} parent=1 // pred_check
      _
    $region7: #{tpu_custom_call.1} parent=1 // pred_check_branch
      %27 = sbr.rel (0) target = $region9
    $region8: #{tpu_custom_call.1} parent=1 // pred_region
      %s29 = ssub.s32 2048, 2048
      %30 = vsyncadd [#allocation6], %s29
      %s31 = sshll.u32 [#allocation5], 4
      %s32 = int_to_ptr.vmem [resolvable:$true] %s31
      %37 = dma.hbm_to_vmem [thread:$0]  %s1, 2048, %s32, [#allocation6], 64, 64, 4
    $region9: #{tpu_custom_call.1} parent=1 // pred_fallthru
      _
    // Predicated region
    $region10: #{tpu_custom_call.1} parent=1 // pred_check
      _
    $region11: #{tpu_custom_call.1} parent=1 // pred_check_branch
      %39 = sbr.rel (0) target = $region13
    $region12: #{tpu_custom_call.1} parent=1 // pred_region
      %s41 = ssub.s32 1024, 1024
      %42 = vsyncadd [#allocation6], %s41
      %s43 = sshll.u32 [#allocation7], 4
      %s44 = int_to_ptr.vmem [resolvable:$true] %s43
      %49 = dma.hbm_to_vmem [thread:$0]  %s2, 1024, %s44, [#allocation6], 64, 64, 4
    $region13: #{tpu_custom_call.1} parent=1 // pred_fallthru
      _
    // Predicated region
    $region14: #{tpu_custom_call.1} parent=1 // pred_check
      _
    $region15: #{tpu_custom_call.1} parent=1 // pred_check_branch
      %51 = sbr.rel (0) target = $region17
    $region16: #{tpu_custom_call.1} parent=1 // pred_region
      %s53 = ssub.s32 1024, 1024
      %54 = vsyncadd [#allocation9], %s53
      %s55 = sshll.u32 [#allocation8], 4
      %s56 = int_to_ptr.vmem [resolvable:$true] %s55
      %61 = dma.hbm_to_vmem [thread:$0]  %s3, 1024, %s56, [#allocation9], 64, 64, 4
    $region17: #{tpu_custom_call.1} parent=1 // pred_fallthru
      _
    // Predicated region
    $region18: #{tpu_custom_call.1} parent=1 // pred_check
      _
    $region19: #{tpu_custom_call.1} parent=1 // pred_check_branch
      %63 = sbr.rel (0) target = $region21
    $region20: #{tpu_custom_call.1} parent=1 // pred_region
      _
    $region21: #{tpu_custom_call.1} parent=1 // pred_fallthru
      _
    // Predicated region
    $region22: #{tpu_custom_call.1} parent=1 // pred_check
      _
    $region23: #{tpu_custom_call.1} parent=1 // pred_check_branch
      %65 = sbr.rel (0) target = $region25
    $region24: #{tpu_custom_call.1} parent=1 // pred_region
      %66 = dma.done [#allocation3], 4096
    $region25: #{tpu_custom_call.1} parent=1 // pred_fallthru
      _
    // Predicated region
    $region26: #{tpu_custom_call.1} parent=1 // pred_check
      _
    $region27: #{tpu_custom_call.1} parent=1 // pred_check_branch
      %68 = sbr.rel (0) target = $region29
    $region28: #{tpu_custom_call.1} parent=1 // pred_region
      %69 = dma.done [#allocation6], 2048
    $region29: #{tpu_custom_call.1} parent=1 // pred_fallthru
      _
    // Predicated region
    $region30: #{tpu_custom_call.1} parent=1 // pred_check
      _
    $region31: #{tpu_custom_call.1} parent=1 // pred_check_branch
      %71 = sbr.rel (0) target = $region33
    $region32: #{tpu_custom_call.1} parent=1 // pred_region
      %72 = dma.done [#allocation6], 1024
    $region33: #{tpu_custom_call.1} parent=1 // pred_fallthru
      _
    // Predicated region
    $region34: #{tpu_custom_call.1} parent=1 // pred_check
      _
    $region35: #{tpu_custom_call.1} parent=1 // pred_check_branch
      %74 = sbr.rel (0) target = $region37
    $region36: #{tpu_custom_call.1} parent=1 // pred_region
      %75 = dma.done [#allocation9], 1024
    $region37: #{tpu_custom_call.1} parent=1 // pred_fallthru
      _
    %v77 = vld [vmem:[#allocation2] sm:$0xff]
    %v78 = vld [vmem:[#allocation2 + $0x8] sm:$0xff]
    %v79 = vld [vmem:[#allocation2 + $0x10] sm:$0xff]
    %v80 = vld [vmem:[#allocation2 + $0x18] sm:$0xff]
    %v81 = vld [vmem:[#allocation2 + $0x20] sm:$0xff]
    %v82 = vld [vmem:[#allocation2 + $0x28] sm:$0xff]
    %v83 = vld [vmem:[#allocation2 + $0x30] sm:$0xff]
    %v84 = vld [vmem:[#allocation2 + $0x38] sm:$0xff]
    %v85 = vld [vmem:[#allocation2 + $0x40] sm:$0xff]
    %v86 = vld [vmem:[#allocation2 + $0x48] sm:$0xff]
    %v87 = vld [vmem:[#allocation2 + $0x50] sm:$0xff]
    %v88 = vld [vmem:[#allocation2 + $0x58] sm:$0xff]
    %v89 = vld [vmem:[#allocation2 + $0x60] sm:$0xff]
    %v90 = vld [vmem:[#allocation2 + $0x68] sm:$0xff]
    %v91 = vld [vmem:[#allocation2 + $0x70] sm:$0xff]
    %v92 = vld [vmem:[#allocation2 + $0x78] sm:$0xff]
    %v93 = vld [vmem:[#allocation2 + $0x80] sm:$0xff]
    %v94 = vld [vmem:[#allocation2 + $0x88] sm:$0xff]
    %v95 = vld [vmem:[#allocation2 + $0x90] sm:$0xff]
    %v96 = vld [vmem:[#allocation2 + $0x98] sm:$0xff]
    %v97 = vld [vmem:[#allocation2 + $0xa0] sm:$0xff]
    %v98 = vld [vmem:[#allocation2 + $0xa8] sm:$0xff]
    %v99 = vld [vmem:[#allocation2 + $0xb0] sm:$0xff]
    %v100 = vld [vmem:[#allocation2 + $0xb8] sm:$0xff]
    %v101 = vld [vmem:[#allocation2 + $0xc0] sm:$0xff]
    %v102 = vld [vmem:[#allocation2 + $0xc8] sm:$0xff]
    %v103 = vld [vmem:[#allocation2 + $0xd0] sm:$0xff]
    %v104 = vld [vmem:[#allocation2 + $0xd8] sm:$0xff]
    %v105 = vld [vmem:[#allocation2 + $0xe0] sm:$0xff]
    %v106 = vld [vmem:[#allocation2 + $0xe8] sm:$0xff]
    %v107 = vld [vmem:[#allocation2 + $0xf0] sm:$0xff]
    %v108 = vld [vmem:[#allocation2 + $0xf8] sm:$0xff]
    %v109 = vld [vmem:[%s4] sm:$0x1]
    %v110 = vld [vmem:[%s4 + $0x1] sm:$0x1]
    %v111 = vld [vmem:[%s4 + $0x2] sm:$0x1]
    %v112 = vld [vmem:[#allocation5] sm:$0xf]
    %v113 = vld [vmem:[#allocation5 + $0x4] sm:$0xf]
    %v114 = vld [vmem:[#allocation5 + $0x8] sm:$0xf]
    %v115 = vld [vmem:[#allocation5 + $0xc] sm:$0xf]
    %v116 = vld [vmem:[#allocation5 + $0x10] sm:$0xf]
    %v117 = vld [vmem:[#allocation5 + $0x14] sm:$0xf]
    %v118 = vld [vmem:[#allocation5 + $0x18] sm:$0xf]
    %v119 = vld [vmem:[#allocation5 + $0x1c] sm:$0xf]
    %v120 = vld [vmem:[#allocation5 + $0x20] sm:$0xf]
    %v121 = vld [vmem:[#allocation5 + $0x24] sm:$0xf]
    %v122 = vld [vmem:[#allocation5 + $0x28] sm:$0xf]
    %v123 = vld [vmem:[#allocation5 + $0x2c] sm:$0xf]
    %v124 = vld [vmem:[#allocation5 + $0x30] sm:$0xf]
    %v125 = vld [vmem:[#allocation5 + $0x34] sm:$0xf]
    %v126 = vld [vmem:[#allocation5 + $0x38] sm:$0xf]
    %v127 = vld [vmem:[#allocation5 + $0x3c] sm:$0xf]
    %v128 = vld [vmem:[#allocation5 + $0x40] sm:$0xf]
    %v129 = vld [vmem:[#allocation5 + $0x44] sm:$0xf]
    %v130 = vld [vmem:[#allocation5 + $0x48] sm:$0xf]
    %v131 = vld [vmem:[#allocation5 + $0x4c] sm:$0xf]
    %v132 = vld [vmem:[#allocation5 + $0x50] sm:$0xf]
    %v133 = vld [vmem:[#allocation5 + $0x54] sm:$0xf]
    %v134 = vld [vmem:[#allocation5 + $0x58] sm:$0xf]
    %v135 = vld [vmem:[#allocation5 + $0x5c] sm:$0xf]
    %v136 = vld [vmem:[#allocation5 + $0x60] sm:$0xf]
    %v137 = vld [vmem:[#allocation5 + $0x64] sm:$0xf]
    %v138 = vld [vmem:[#allocation5 + $0x68] sm:$0xf]
    %v139 = vld [vmem:[#allocation5 + $0x6c] sm:$0xf]
    %v140 = vld [vmem:[#allocation5 + $0x70] sm:$0xf]
    %v141 = vld [vmem:[#allocation5 + $0x74] sm:$0xf]
    %v142 = vld [vmem:[#allocation5 + $0x78] sm:$0xf]
    %v143 = vld [vmem:[#allocation5 + $0x7c] sm:$0xf]
    %v144 = vlaneseq
    %v145 = vshrl.u32 %v144, 7
    %v146 = vsub.s32 0, %v145
    %v147 = vrot.slane %v109, %v146
    %v180 = vunpack.c.l.b16 %v77
    %v181 = vunpack.c.h.b16 %v77
    %v182 = vunpack.c.l.b16 %v78
    %v183 = vunpack.c.h.b16 %v78
    %v184 = vunpack.c.l.b16 %v79
    %v185 = vunpack.c.h.b16 %v79
    %v186 = vunpack.c.l.b16 %v80
    %v187 = vunpack.c.h.b16 %v80
    %v188 = vunpack.c.l.b16 %v81
    %v189 = vunpack.c.h.b16 %v81
    %v190 = vunpack.c.l.b16 %v82
    %v191 = vunpack.c.h.b16 %v82
    %v192 = vunpack.c.l.b16 %v83
    %v193 = vunpack.c.h.b16 %v83
    %v194 = vunpack.c.l.b16 %v84
    %v195 = vunpack.c.h.b16 %v84
    %v196 = vunpack.c.l.b16 %v85
    %v197 = vunpack.c.h.b16 %v85
    %v198 = vunpack.c.l.b16 %v86
    %v199 = vunpack.c.h.b16 %v86
    %v200 = vunpack.c.l.b16 %v87
    %v201 = vunpack.c.h.b16 %v87
    %v202 = vunpack.c.l.b16 %v88
    %v203 = vunpack.c.h.b16 %v88
    %v204 = vunpack.c.l.b16 %v89
    %v205 = vunpack.c.h.b16 %v89
    %v206 = vunpack.c.l.b16 %v90
    %v207 = vunpack.c.h.b16 %v90
    %v208 = vunpack.c.l.b16 %v91
    %v209 = vunpack.c.h.b16 %v91
    %v210 = vunpack.c.l.b16 %v92
    %v211 = vunpack.c.h.b16 %v92
    %v212 = vunpack.c.l.b16 %v93
    %v213 = vunpack.c.h.b16 %v93
    %v214 = vunpack.c.l.b16 %v94
    %v215 = vunpack.c.h.b16 %v94
    %v216 = vunpack.c.l.b16 %v95
    %v217 = vunpack.c.h.b16 %v95
    %v218 = vunpack.c.l.b16 %v96
    %v219 = vunpack.c.h.b16 %v96
    %v220 = vunpack.c.l.b16 %v97
    %v221 = vunpack.c.h.b16 %v97
    %v222 = vunpack.c.l.b16 %v98
    %v223 = vunpack.c.h.b16 %v98
    %v224 = vunpack.c.l.b16 %v99
    %v225 = vunpack.c.h.b16 %v99
    %v226 = vunpack.c.l.b16 %v100
    %v227 = vunpack.c.h.b16 %v100
    %v228 = vunpack.c.l.b16 %v101
    %v229 = vunpack.c.h.b16 %v101
    %v230 = vunpack.c.l.b16 %v102
    %v231 = vunpack.c.h.b16 %v102
    %v232 = vunpack.c.l.b16 %v103
    %v233 = vunpack.c.h.b16 %v103
    %v234 = vunpack.c.l.b16 %v104
    %v235 = vunpack.c.h.b16 %v104
    %v236 = vunpack.c.l.b16 %v105
    %v237 = vunpack.c.h.b16 %v105
    %v238 = vunpack.c.l.b16 %v106
    %v239 = vunpack.c.h.b16 %v106
    %v240 = vunpack.c.l.b16 %v107
    %v241 = vunpack.c.h.b16 %v107
    %v242 = vunpack.c.l.b16 %v108
    %v243 = vunpack.c.h.b16 %v108
    %v244 = vpack.c.b16 %v182, %v180
    %v245 = vpack.c.b16 %v183, %v181
    %v246 = vpack.c.b16 %v186, %v184
    %v247 = vpack.c.b16 %v187, %v185
    %v248 = vpack.c.b16 %v190, %v188
    %v249 = vpack.c.b16 %v191, %v189
    %v250 = vpack.c.b16 %v194, %v192
    %v251 = vpack.c.b16 %v195, %v193
    %v252 = vpack.c.b16 %v198, %v196
    %v253 = vpack.c.b16 %v199, %v197
    %v254 = vpack.c.b16 %v202, %v200
    %v255 = vpack.c.b16 %v203, %v201
    %v256 = vpack.c.b16 %v206, %v204
    %v257 = vpack.c.b16 %v207, %v205
    %v258 = vpack.c.b16 %v210, %v208
    %v259 = vpack.c.b16 %v211, %v209
    %v260 = vpack.c.b16 %v214, %v212
    %v261 = vpack.c.b16 %v215, %v213
    %v262 = vpack.c.b16 %v218, %v216
    %v263 = vpack.c.b16 %v219, %v217
    %v264 = vpack.c.b16 %v222, %v220
    %v265 = vpack.c.b16 %v223, %v221
    %v266 = vpack.c.b16 %v226, %v224
    %v267 = vpack.c.b16 %v227, %v225
    %v268 = vpack.c.b16 %v230, %v228
    %v269 = vpack.c.b16 %v231, %v229
    %v270 = vpack.c.b16 %v234, %v232
    %v271 = vpack.c.b16 %v235, %v233
    %v272 = vpack.c.b16 %v238, %v236
    %v273 = vpack.c.b16 %v239, %v237
    %v274 = vpack.c.b16 %v242, %v240
    %v275 = vpack.c.b16 %v243, %v241
    %v340 = vunpack.c.l.b16 %v112
    %v341 = vunpack.c.l.b16 %v113
    %v342 = vunpack.c.l.b16 %v114
    %v343 = vunpack.c.l.b16 %v115
    %v344 = vunpack.c.l.b16 %v116
    %v345 = vunpack.c.l.b16 %v117
    %v346 = vunpack.c.l.b16 %v118
    %v347 = vunpack.c.l.b16 %v119
    %v348 = vunpack.c.l.b16 %v120
    %v349 = vunpack.c.l.b16 %v121
    %v350 = vunpack.c.l.b16 %v122
    %v351 = vunpack.c.l.b16 %v123
    %v352 = vunpack.c.l.b16 %v124
    %v353 = vunpack.c.l.b16 %v125
    %v354 = vunpack.c.l.b16 %v126
    %v355 = vunpack.c.l.b16 %v127
    %v356 = vunpack.c.l.b16 %v128
    %v357 = vunpack.c.l.b16 %v129
    %v358 = vunpack.c.l.b16 %v130
    %v359 = vunpack.c.l.b16 %v131
    %v360 = vunpack.c.l.b16 %v132
    %v361 = vunpack.c.l.b16 %v133
    %v362 = vunpack.c.l.b16 %v134
    %v363 = vunpack.c.l.b16 %v135
    %v364 = vunpack.c.l.b16 %v136
    %v365 = vunpack.c.l.b16 %v137
    %v366 = vunpack.c.l.b16 %v138
    %v367 = vunpack.c.l.b16 %v139
    %v368 = vunpack.c.l.b16 %v140
    %v369 = vunpack.c.l.b16 %v141
    %v370 = vunpack.c.l.b16 %v142
    %v371 = vunpack.c.l.b16 %v143
    %v372 = vpack.c.b16 %v341, %v340
    %v373 = vpack.c.b16 %v343, %v342
    %v374 = vpack.c.b16 %v345, %v344
    %v375 = vpack.c.b16 %v347, %v346
    %v376 = vpack.c.b16 %v349, %v348
    %v377 = vpack.c.b16 %v351, %v350
    %v378 = vpack.c.b16 %v353, %v352
    %v379 = vpack.c.b16 %v355, %v354
    %v380 = vpack.c.b16 %v357, %v356
    %v381 = vpack.c.b16 %v359, %v358
    %v382 = vpack.c.b16 %v361, %v360
    %v383 = vpack.c.b16 %v363, %v362
    %v384 = vpack.c.b16 %v365, %v364
    %v385 = vpack.c.b16 %v367, %v366
    %v386 = vpack.c.b16 %v369, %v368
    %v387 = vpack.c.b16 %v371, %v370
    %404 = vmatprep.subr.bf16.mxu0 0
    %405 = vmatpush1.bf16.msra.mxu0 %v379
    %406 = vmatprep.subr.bf16.mxu0 0
    %407 = vmatpush1.bf16.msra.mxu0 %v378
    %408 = vmatprep.subr.bf16.mxu0 0
    %409 = vmatpush1.bf16.msra.mxu0 %v377
    %410 = vmatprep.subr.bf16.mxu0 0
    %411 = vmatpush1.bf16.msra.mxu0 %v376
    %412 = vmatprep.subr.bf16.mxu0 0
    %413 = vmatpush1.bf16.msra.mxu0 %v375
    %414 = vmatprep.subr.bf16.mxu0 0
    %415 = vmatpush1.bf16.msra.mxu0 %v374
    %416 = vmatprep.subr.bf16.mxu0 0
    %417 = vmatpush1.bf16.msra.mxu0 %v373
    %418 = vmatprep.subr.bf16.mxu0 0
    %419 = vmatpush1.bf16.msra.mxu0 %v372
    %420 = vmatprep.subr.bf16.mxu0 0
    %421 = vmatpush2.bf16.msra.mxu0 %v387
    %422 = vmatprep.subr.bf16.mxu0 0
    %423 = vmatpush2.bf16.msra.mxu0 %v386
    %424 = vmatprep.subr.bf16.mxu0 0
    %425 = vmatpush2.bf16.msra.mxu0 %v385
    %426 = vmatprep.subr.bf16.mxu0 0
    %427 = vmatpush2.bf16.msra.mxu0 %v384
    %428 = vmatprep.subr.bf16.mxu0 0
    %429 = vmatpush2.bf16.msra.mxu0 %v383
    %430 = vmatprep.subr.bf16.mxu0 0
    %431 = vmatpush2.bf16.msra.mxu0 %v382
    %432 = vmatprep.subr.bf16.mxu0 0
    %433 = vmatpush2.bf16.msra.mxu0 %v381
    %434 = vmatprep.subr.bf16.mxu0 0
    %435 = vmatpush2.bf16.msra.mxu0 %v380
    %436 = vmatprep.mubr.bf16.mxu0 %v245
    %437 = vmatmul.mubr.bf16.gmra.mxu0 %v244
    %v438 = vpop.f32.mrf.mxu0
    %v439 = vadd.f32 %v147, %v438
    %v440 = vpop.f32.mrf.mxu0
    %v441 = vpop.f32.mrf.mxu0
    %v442 = vadd.f32 %v147, %v441
    %v443 = vpop.f32.mrf.mxu0
    %444 = vmatprep.mubr.bf16.mxu0 %v247
    %445 = vmatmul.mubr.bf16.gmra.mxu0 %v246
    %v446 = vpop.f32.mrf.mxu0
    %v447 = vadd.f32 %v147, %v446
    %v448 = vpop.f32.mrf.mxu0
    %v449 = vpop.f32.mrf.mxu0
    %v450 = vadd.f32 %v147, %v449
    %v451 = vpop.f32.mrf.mxu0
    %452 = vmatprep.mubr.bf16.mxu0 %v249
    %453 = vmatmul.mubr.bf16.gmra.mxu0 %v248
    %v454 = vpop.f32.mrf.mxu0
    %v455 = vadd.f32 %v147, %v454
    %v456 = vpop.f32.mrf.mxu0
    %v457 = vpop.f32.mrf.mxu0
    %v458 = vadd.f32 %v147, %v457
    %v459 = vpop.f32.mrf.mxu0
    %460 = vmatprep.mubr.bf16.mxu0 %v251
    %461 = vmatmul.mubr.bf16.gmra.mxu0 %v250
    %v462 = vpop.f32.mrf.mxu0
    %v463 = vadd.f32 %v147, %v462
    %v464 = vpop.f32.mrf.mxu0
    %v465 = vpop.f32.mrf.mxu0
    %v466 = vadd.f32 %v147, %v465
    %v467 = vpop.f32.mrf.mxu0
    %468 = vmatprep.mubr.bf16.mxu0 %v253
    %469 = vmatmul.mubr.bf16.gmra.mxu0 %v252
    %v470 = vpop.f32.mrf.mxu0
    %v471 = vadd.f32 %v147, %v470
    %v472 = vpop.f32.mrf.mxu0
    %v473 = vpop.f32.mrf.mxu0
    %v474 = vadd.f32 %v147, %v473
    %v475 = vpop.f32.mrf.mxu0
    %476 = vmatprep.mubr.bf16.mxu0 %v255
    %477 = vmatmul.mubr.bf16.gmra.mxu0 %v254
    %v478 = vpop.f32.mrf.mxu0
    %v479 = vadd.f32 %v147, %v478
    %v480 = vpop.f32.mrf.mxu0
    %v481 = vpop.f32.mrf.mxu0
    %v482 = vadd.f32 %v147, %v481
    %v483 = vpop.f32.mrf.mxu0
    %484 = vmatprep.mubr.bf16.mxu0 %v257
    %485 = vmatmul.mubr.bf16.gmra.mxu0 %v256
    %v486 = vpop.f32.mrf.mxu0
    %v487 = vadd.f32 %v147, %v486
    %v488 = vpop.f32.mrf.mxu0
    %v489 = vpop.f32.mrf.mxu0
    %v490 = vadd.f32 %v147, %v489
    %v491 = vpop.f32.mrf.mxu0
    %492 = vmatprep.mubr.bf16.mxu0 %v259
    %493 = vmatmul.mubr.bf16.gmra.mxu0 %v258
    %v494 = vpop.f32.mrf.mxu0
    %v495 = vadd.f32 %v147, %v494
    %v496 = vpop.f32.mrf.mxu0
    %v497 = vpop.f32.mrf.mxu0
    %v498 = vadd.f32 %v147, %v497
    %v499 = vpop.f32.mrf.mxu0
    %500 = vmatprep.mubr.bf16.mxu0 %v261
    %501 = vmatmul.mubr.bf16.gmra.mxu0 %v260
    %v502 = vpop.f32.mrf.mxu0
    %v503 = vadd.f32 %v147, %v502
    %v504 = vpop.f32.mrf.mxu0
    %v505 = vpop.f32.mrf.mxu0
    %v506 = vadd.f32 %v147, %v505
    %v507 = vpop.f32.mrf.mxu0
    %508 = vmatprep.mubr.bf16.mxu0 %v263
    %509 = vmatmul.mubr.bf16.gmra.mxu0 %v262
    %v510 = vpop.f32.mrf.mxu0
    %v511 = vadd.f32 %v147, %v510
    %v512 = vpop.f32.mrf.mxu0
    %v513 = vpop.f32.mrf.mxu0
    %v514 = vadd.f32 %v147, %v513
    %v515 = vpop.f32.mrf.mxu0
    %516 = vmatprep.mubr.bf16.mxu0 %v265
    %517 = vmatmul.mubr.bf16.gmra.mxu0 %v264
    %v518 = vpop.f32.mrf.mxu0
    %v519 = vadd.f32 %v147, %v518
    %v520 = vpop.f32.mrf.mxu0
    %v521 = vpop.f32.mrf.mxu0
    %v522 = vadd.f32 %v147, %v521
    %v523 = vpop.f32.mrf.mxu0
    %524 = vmatprep.mubr.bf16.mxu0 %v267
    %525 = vmatmul.mubr.bf16.gmra.mxu0 %v266
    %v526 = vpop.f32.mrf.mxu0
    %v527 = vadd.f32 %v147, %v526
    %v528 = vpop.f32.mrf.mxu0
    %v529 = vpop.f32.mrf.mxu0
    %v530 = vadd.f32 %v147, %v529
    %v531 = vpop.f32.mrf.mxu0
    %532 = vmatprep.mubr.bf16.mxu0 %v269
    %533 = vmatmul.mubr.bf16.gmra.mxu0 %v268
    %v534 = vpop.f32.mrf.mxu0
    %v535 = vadd.f32 %v147, %v534
    %v536 = vpop.f32.mrf.mxu0
    %v537 = vpop.f32.mrf.mxu0
    %v538 = vadd.f32 %v147, %v537
    %v539 = vpop.f32.mrf.mxu0
    %540 = vmatprep.mubr.bf16.mxu0 %v271
    %541 = vmatmul.mubr.bf16.gmra.mxu0 %v270
    %v542 = vpop.f32.mrf.mxu0
    %v543 = vadd.f32 %v147, %v542
    %v544 = vpop.f32.mrf.mxu0
    %v545 = vpop.f32.mrf.mxu0
    %v546 = vadd.f32 %v147, %v545
    %v547 = vpop.f32.mrf.mxu0
    %548 = vmatprep.mubr.bf16.mxu0 %v273
    %549 = vmatmul.mubr.bf16.gmra.mxu0 %v272
    %v550 = vpop.f32.mrf.mxu0
    %v551 = vadd.f32 %v147, %v550
    %v552 = vpop.f32.mrf.mxu0
    %v553 = vpop.f32.mrf.mxu0
    %v554 = vadd.f32 %v147, %v553
    %v555 = vpop.f32.mrf.mxu0
    %556 = vmatprep.mubr.bf16.mxu0 %v275
    %557 = vmatmul.mubr.bf16.gmra.mxu0 %v274
    %v558 = vpop.f32.mrf.mxu0
    %v559 = vadd.f32 %v147, %v558
    %v560 = vpop.f32.mrf.mxu0
    %v561 = vpop.f32.mrf.mxu0
    %v562 = vadd.f32 %v147, %v561
    %v563 = vpop.f32.mrf.mxu0
    %564 = vdwg.mxu0
    %v565 = vadd.f32 %v439, %v442
    %v566 = vadd.f32 %v565, %v447
    %v567 = vadd.f32 %v566, %v450
    %v568 = vadd.f32 %v567, %v455
    %v569 = vadd.f32 %v568, %v458
    %v570 = vadd.f32 %v569, %v463
    %v571 = vadd.f32 %v570, %v466
    %v572 = vrot.slane %v571, 4
    %v573 = vadd.f32 %v571, %v572
    %v574 = vrot.slane %v573, 2
    %v575 = vadd.f32 %v573, %v574
    %v576 = vrot.slane %v575, 1
    %v577 = vadd.f32 %v575, %v576
    %v578 = vadd.f32 %v471, %v474
    %v579 = vadd.f32 %v578, %v479
    %v580 = vadd.f32 %v579, %v482
    %v581 = vadd.f32 %v580, %v487
    %v582 = vadd.f32 %v581, %v490
    %v583 = vadd.f32 %v582, %v495
    %v584 = vadd.f32 %v583, %v498
    %v585 = vrot.slane %v584, 4
    %v586 = vadd.f32 %v584, %v585
    %v587 = vrot.slane %v586, 2
    %v588 = vadd.f32 %v586, %v587
    %v589 = vrot.slane %v588, 1
    %v590 = vadd.f32 %v588, %v589
    %v591 = vadd.f32 %v503, %v506
    %v592 = vadd.f32 %v591, %v511
    %v593 = vadd.f32 %v592, %v514
    %v594 = vadd.f32 %v593, %v519
    %v595 = vadd.f32 %v594, %v522
    %v596 = vadd.f32 %v595, %v527
    %v597 = vadd.f32 %v596, %v530
    %v598 = vrot.slane %v597, 4
    %v599 = vadd.f32 %v597, %v598
    %v600 = vrot.slane %v599, 2
    %v601 = vadd.f32 %v599, %v600
    %v602 = vrot.slane %v601, 1
    %v603 = vadd.f32 %v601, %v602
    %v604 = vadd.f32 %v535, %v538
    %v605 = vadd.f32 %v604, %v543
    %v606 = vadd.f32 %v605, %v546
    %v607 = vadd.f32 %v606, %v551
    %v608 = vadd.f32 %v607, %v554
    %v609 = vadd.f32 %v608, %v559
    %v610 = vadd.f32 %v609, %v562
    %v611 = vrot.slane %v610, 4
    %v612 = vadd.f32 %v610, %v611
    %v613 = vrot.slane %v612, 2
    %v614 = vadd.f32 %v612, %v613
    %v615 = vrot.slane %v614, 1
    %v616 = vadd.f32 %v614, %v615
    %v617 = vrcp.pop 64.0
    %v618 = vmul.f32 %v577, %v617
    %v619 = vmul.f32 %v590, %v617
    %v620 = vmul.f32 %v603, %v617
    %v621 = vmul.f32 %v616, %v617
    %v622 = vpack.c.bf16 %v618, %v618
    %v623 = vpack.c.bf16 %v619, %v619
    %v624 = vpack.c.bf16 %v620, %v620
    %v625 = vpack.c.bf16 %v621, %v621
    %v626 = vld [vmem:[#allocation7] sm:$0xf]
    %v627 = vld [vmem:[#allocation7 + $0x4] sm:$0xf]
    %v628 = vld [vmem:[#allocation7 + $0x8] sm:$0xf]
    %v629 = vld [vmem:[#allocation7 + $0xc] sm:$0xf]
    %v630 = vld [vmem:[#allocation7 + $0x10] sm:$0xf]
    %v631 = vld [vmem:[#allocation7 + $0x14] sm:$0xf]
    %v632 = vld [vmem:[#allocation7 + $0x18] sm:$0xf]
    %v633 = vld [vmem:[#allocation7 + $0x1c] sm:$0xf]
    %v634 = vld [vmem:[#allocation7 + $0x20] sm:$0xf]
    %v635 = vld [vmem:[#allocation7 + $0x24] sm:$0xf]
    %v636 = vld [vmem:[#allocation7 + $0x28] sm:$0xf]
    %v637 = vld [vmem:[#allocation7 + $0x2c] sm:$0xf]
    %v638 = vld [vmem:[#allocation7 + $0x30] sm:$0xf]
    %v639 = vld [vmem:[#allocation7 + $0x34] sm:$0xf]
    %v640 = vld [vmem:[#allocation7 + $0x38] sm:$0xf]
    %v641 = vld [vmem:[#allocation7 + $0x3c] sm:$0xf]
    %v642 = vlaneseq
    %v643 = vshrl.u32 %v642, 7
    %v644 = vsub.s32 0, %v643
    %v645 = vrot.slane %v111, %v644
    %v650 = vunpack.c.l.b16 %v622
    %v651 = vunpack.c.l.b16 %v623
    %v652 = vunpack.c.l.b16 %v624
    %v653 = vunpack.c.l.b16 %v625
    %vm654 = vcmask 1041409
    %v655 = vsel %vm654, %v651, %v650
    %vm656 = vcmask 1042434
    %v657 = vsel %vm656, %v652, %v655
    %vm658 = vcmask 1043459
    %v659 = vsel %vm658, %v653, %v657
    %v660 = vpack.c.b16 %v659, %v659
    %v678 = vunpack.c.l.b16 %v626
    %v679 = vunpack.c.l.b16 %v627
    %v680 = vunpack.c.l.b16 %v628
    %v681 = vunpack.c.l.b16 %v629
    %v682 = vunpack.c.l.b16 %v630
    %v683 = vunpack.c.l.b16 %v631
    %v684 = vunpack.c.l.b16 %v632
    %v685 = vunpack.c.l.b16 %v633
    %v686 = vunpack.c.l.b16 %v634
    %v687 = vunpack.c.l.b16 %v635
    %v688 = vunpack.c.l.b16 %v636
    %v689 = vunpack.c.l.b16 %v637
    %v690 = vunpack.c.l.b16 %v638
    %v691 = vunpack.c.l.b16 %v639
    %v692 = vunpack.c.l.b16 %v640
    %v693 = vunpack.c.l.b16 %v641
    %v694 = vpack.c.b16 %v679, %v678
    %v695 = vpack.c.b16 %v681, %v680
    %v696 = vpack.c.b16 %v683, %v682
    %v697 = vpack.c.b16 %v685, %v684
    %v698 = vpack.c.b16 %v687, %v686
    %v699 = vpack.c.b16 %v689, %v688
    %v700 = vpack.c.b16 %v691, %v690
    %v701 = vpack.c.b16 %v693, %v692
    %710 = vmatprep.subr.bf16.mxu0 0
    %711 = vmatpush1.bf16.msra.mxu0 %v701
    %712 = vmatprep.subr.bf16.mxu0 0
    %713 = vmatpush1.bf16.msra.mxu0 %v700
    %714 = vmatprep.subr.bf16.mxu0 0
    %715 = vmatpush1.bf16.msra.mxu0 %v699
    %716 = vmatprep.subr.bf16.mxu0 0
    %717 = vmatpush1.bf16.msra.mxu0 %v698
    %718 = vmatprep.subr.bf16.mxu0 0
    %719 = vmatpush1.bf16.msra.mxu0 %v697
    %720 = vmatprep.subr.bf16.mxu0 0
    %721 = vmatpush1.bf16.msra.mxu0 %v696
    %722 = vmatprep.subr.bf16.mxu0 0
    %723 = vmatpush1.bf16.msra.mxu0 %v695
    %724 = vmatprep.subr.bf16.mxu0 0
    %725 = vmatpush1.bf16.msra.mxu0 %v694
    %726 = vmatprep.subr.bf16.mxu0 0
    %727 = vmatpush2.bf16.msra.mxu0 0
    %728 = vmatprep.subr.bf16.mxu0 0
    %729 = vmatpush2.bf16.msra.mxu0 0
    %730 = vmatprep.subr.bf16.mxu0 0
    %731 = vmatpush2.bf16.msra.mxu0 0
    %732 = vmatprep.subr.bf16.mxu0 0
    %733 = vmatpush2.bf16.msra.mxu0 0
    %734 = vmatprep.subr.bf16.mxu0 0
    %735 = vmatpush2.bf16.msra.mxu0 0
    %736 = vmatprep.subr.bf16.mxu0 0
    %737 = vmatpush2.bf16.msra.mxu0 0
    %738 = vmatprep.subr.bf16.mxu0 0
    %739 = vmatpush2.bf16.msra.mxu0 0
    %740 = vmatprep.subr.bf16.mxu0 0
    %741 = vmatpush2.bf16.msra.mxu0 0
    %742 = vmatprep.mubr.bf16.mxu0 0
    %743 = vmatmul.mubr.bf16.gmra.mxu0 %v660
    %v744 = vpop.f32.mrf.mxu0
    %v745 = vadd.f32 %v645, %v744
    %v746 = vpop.f32.mrf.mxu0
    %v747 = vpop.f32.mrf.mxu0
    %v748 = vpop.f32.mrf.mxu0
    %749 = vdwg.mxu0
    %v750 = vmax.f32 %v745, 0.0
    %v751 = vpack.c.bf16 %v750, %v750
    %v752 = vld [vmem:[#allocation8] sm:$0xf]
    %v753 = vld [vmem:[#allocation8 + $0x4] sm:$0xf]
    %v754 = vld [vmem:[#allocation8 + $0x8] sm:$0xf]
    %v755 = vld [vmem:[#allocation8 + $0xc] sm:$0xf]
    %v756 = vld [vmem:[#allocation8 + $0x10] sm:$0xf]
    %v757 = vld [vmem:[#allocation8 + $0x14] sm:$0xf]
    %v758 = vld [vmem:[#allocation8 + $0x18] sm:$0xf]
    %v759 = vld [vmem:[#allocation8 + $0x1c] sm:$0xf]
    %v760 = vld [vmem:[#allocation8 + $0x20] sm:$0xf]
    %v761 = vld [vmem:[#allocation8 + $0x24] sm:$0xf]
    %v762 = vld [vmem:[#allocation8 + $0x28] sm:$0xf]
    %v763 = vld [vmem:[#allocation8 + $0x2c] sm:$0xf]
    %v764 = vld [vmem:[#allocation8 + $0x30] sm:$0xf]
    %v765 = vld [vmem:[#allocation8 + $0x34] sm:$0xf]
    %v766 = vld [vmem:[#allocation8 + $0x38] sm:$0xf]
    %v767 = vld [vmem:[#allocation8 + $0x3c] sm:$0xf]
    %v768 = vlaneseq
    %v769 = vshrl.u32 %v768, 7
    %v770 = vsub.s32 0, %v769
    %v771 = vrot.slane %v110, %v770
    %v788 = vunpack.c.l.b16 %v752
    %v789 = vunpack.c.l.b16 %v753
    %v790 = vunpack.c.l.b16 %v754
    %v791 = vunpack.c.l.b16 %v755
    %v792 = vunpack.c.l.b16 %v756
    %v793 = vunpack.c.l.b16 %v757
    %v794 = vunpack.c.l.b16 %v758
    %v795 = vunpack.c.l.b16 %v759
    %v796 = vunpack.c.l.b16 %v760
    %v797 = vunpack.c.l.b16 %v761
    %v798 = vunpack.c.l.b16 %v762
    %v799 = vunpack.c.l.b16 %v763
    %v800 = vunpack.c.l.b16 %v764
    %v801 = vunpack.c.l.b16 %v765
    %v802 = vunpack.c.l.b16 %v766
    %v803 = vunpack.c.l.b16 %v767
    %v804 = vpack.c.b16 %v789, %v788
    %v805 = vpack.c.b16 %v791, %v790
    %v806 = vpack.c.b16 %v793, %v792
    %v807 = vpack.c.b16 %v795, %v794
    %v808 = vpack.c.b16 %v797, %v796
    %v809 = vpack.c.b16 %v799, %v798
    %v810 = vpack.c.b16 %v801, %v800
    %v811 = vpack.c.b16 %v803, %v802
    %820 = vmatprep.subr.bf16.mxu0 0
    %821 = vmatpush1.bf16.msra.mxu0 %v811
    %822 = vmatprep.subr.bf16.mxu0 0
    %823 = vmatpush1.bf16.msra.mxu0 %v810
    %824 = vmatprep.subr.bf16.mxu0 0
    %825 = vmatpush1.bf16.msra.mxu0 %v809
    %826 = vmatprep.subr.bf16.mxu0 0
    %827 = vmatpush1.bf16.msra.mxu0 %v808
    %828 = vmatprep.subr.bf16.mxu0 0
    %829 = vmatpush1.bf16.msra.mxu0 %v807
    %830 = vmatprep.subr.bf16.mxu0 0
    %831 = vmatpush1.bf16.msra.mxu0 %v806
    %832 = vmatprep.subr.bf16.mxu0 0
    %833 = vmatpush1.bf16.msra.mxu0 %v805
    %834 = vmatprep.subr.bf16.mxu0 0
    %835 = vmatpush1.bf16.msra.mxu0 %v804
    %836 = vmatprep.subr.bf16.mxu0 0
    %837 = vmatpush2.bf16.msra.mxu0 0
    %838 = vmatprep.subr.bf16.mxu0 0
    %839 = vmatpush2.bf16.msra.mxu0 0
    %840 = vmatprep.subr.bf16.mxu0 0
    %841 = vmatpush2.bf16.msra.mxu0 0
    %842 = vmatprep.subr.bf16.mxu0 0
    %843 = vmatpush2.bf16.msra.mxu0 0
    %844 = vmatprep.subr.bf16.mxu0 0
    %845 = vmatpush2.bf16.msra.mxu0 0
    %846 = vmatprep.subr.bf16.mxu0 0
    %847 = vmatpush2.bf16.msra.mxu0 0
    %848 = vmatprep.subr.bf16.mxu0 0
    %849 = vmatpush2.bf16.msra.mxu0 0
    %850 = vmatprep.subr.bf16.mxu0 0
    %851 = vmatpush2.bf16.msra.mxu0 0
    %852 = vmatprep.mubr.bf16.mxu0 0
    %853 = vmatmul.mubr.bf16.gmra.mxu0 %v751
    %v854 = vpop.f32.mrf.mxu0
    %v855 = vadd.f32 %v771, %v854
    %v856 = vpop.f32.mrf.mxu0
    %v857 = vpop.f32.mrf.mxu0
    %v858 = vpop.f32.mrf.mxu0
    %859 = vdwg.mxu0
    %v860 = vxor.u32 %v855, 2147483648
    %v861 = vmul.f32 %v860, 1.442695
    %v862 = vpow.pop %v861
    %v863 = vadd.f32 %v862, 1.0
    %v864 = vrcp.pop %v863
    %v865 = vmul.f32 1.0, %v864
    %v868 = vunpack.c.l.s4 1966171168
    %v869 = vunpack.c.0.s8 %v868
    %v870 = vlaneseq
    %v871 = vshrl.u32 %v870, 7
    %v872 = vsub.s32 %v869, %v871
    %v873 = vrot.slane %v865, %v872
    %v874 = vcombine.high %v873, %v873
    %v876 = vunpack.c.l.s4 1966171168
    %v877 = vunpack.c.0.s8 %v876
    %v878 = vlaneseq
    %v879 = vshrl.u32 %v878, 7
    %v880 = vsub.s32 %v877, %v879
    %v881 = vrot.slane %v873, %v880
    %v883 = vunpack.c.l.s4 1966171168
    %v884 = vunpack.c.0.s8 %v883
    %v885 = vlaneseq
    %v886 = vshrl.u32 %v885, 7
    %v887 = vsub.s32 %v884, %v886
    %v888 = vrot.slane %v874, %v887
    %v889 = vcombine.high %v881, %v881
    %v890 = vcombine.high %v888, %v888
    %v891 = vlaneseq
    %v892 = vshrl.u32 %v891, 7
    %v893 = vsub.s32 0, %v892
    %v894 = vrot.slane %v881, %v893
    %v895 = vlaneseq
    %v896 = vshrl.u32 %v895, 7
    %v897 = vsub.s32 0, %v896
    %v898 = vrot.slane %v888, %v897
    %v899 = vlaneseq
    %v900 = vshrl.u32 %v899, 7
    %v901 = vsub.s32 0, %v900
    %v902 = vrot.slane %v889, %v901
    %v903 = vlaneseq
    %v904 = vshrl.u32 %v903, 7
    %v905 = vsub.s32 0, %v904
    %v906 = vrot.slane %v890, %v905
    %v911 = vmul.f32 %v439, %v894
    %v912 = vmul.f32 %v442, %v894
    %v913 = vmul.f32 %v447, %v894
    %v914 = vmul.f32 %v450, %v894
    %v915 = vmul.f32 %v455, %v894
    %v916 = vmul.f32 %v458, %v894
    %v917 = vmul.f32 %v463, %v894
    %v918 = vmul.f32 %v466, %v894
    %v919 = vmul.f32 %v471, %v898
    %v920 = vmul.f32 %v474, %v898
    %v921 = vmul.f32 %v479, %v898
    %v922 = vmul.f32 %v482, %v898
    %v923 = vmul.f32 %v487, %v898
    %v924 = vmul.f32 %v490, %v898
    %v925 = vmul.f32 %v495, %v898
    %v926 = vmul.f32 %v498, %v898
    %v927 = vmul.f32 %v503, %v902
    %v928 = vmul.f32 %v506, %v902
    %v929 = vmul.f32 %v511, %v902
    %v930 = vmul.f32 %v514, %v902
    %v931 = vmul.f32 %v519, %v902
    %v932 = vmul.f32 %v522, %v902
    %v933 = vmul.f32 %v527, %v902
    %v934 = vmul.f32 %v530, %v902
    %v935 = vmul.f32 %v535, %v906
    %v936 = vmul.f32 %v538, %v906
    %v937 = vmul.f32 %v543, %v906
    %v938 = vmul.f32 %v546, %v906
    %v939 = vmul.f32 %v551, %v906
    %v940 = vmul.f32 %v554, %v906
    %v941 = vmul.f32 %v559, %v906
    %v942 = vmul.f32 %v562, %v906
    %v943 = vmax.f32 %v911, 0.0
    %v944 = vmax.f32 %v912, 0.0
    %v945 = vmax.f32 %v913, 0.0
    %v946 = vmax.f32 %v914, 0.0
    %v947 = vmax.f32 %v915, 0.0
    %v948 = vmax.f32 %v916, 0.0
    %v949 = vmax.f32 %v917, 0.0
    %v950 = vmax.f32 %v918, 0.0
    %v951 = vmax.f32 %v919, 0.0
    %v952 = vmax.f32 %v920, 0.0
    %v953 = vmax.f32 %v921, 0.0
    %v954 = vmax.f32 %v922, 0.0
    %v955 = vmax.f32 %v923, 0.0
    %v956 = vmax.f32 %v924, 0.0
    %v957 = vmax.f32 %v925, 0.0
    %v958 = vmax.f32 %v926, 0.0
    %v959 = vmax.f32 %v927, 0.0
    %v960 = vmax.f32 %v928, 0.0
    %v961 = vmax.f32 %v929, 0.0
    %v962 = vmax.f32 %v930, 0.0
    %v963 = vmax.f32 %v931, 0.0
    %v964 = vmax.f32 %v932, 0.0
    %v965 = vmax.f32 %v933, 0.0
    %v966 = vmax.f32 %v934, 0.0
    %v967 = vmax.f32 %v935, 0.0
    %v968 = vmax.f32 %v936, 0.0
    %v969 = vmax.f32 %v937, 0.0
    %v970 = vmax.f32 %v938, 0.0
    %v971 = vmax.f32 %v939, 0.0
    %v972 = vmax.f32 %v940, 0.0
    %v973 = vmax.f32 %v941, 0.0
    %v974 = vmax.f32 %v942, 0.0
    %v975 = vunpack.c.l.bf16 %v77
    %v976 = vunpack.c.l.bf16 %v78
    %v977 = vunpack.c.l.bf16 %v79
    %v978 = vunpack.c.l.bf16 %v80
    %v979 = vunpack.c.l.bf16 %v81
    %v980 = vunpack.c.l.bf16 %v82
    %v981 = vunpack.c.l.bf16 %v83
    %v982 = vunpack.c.l.bf16 %v84
    %v983 = vunpack.c.l.bf16 %v85
    %v984 = vunpack.c.l.bf16 %v86
    %v985 = vunpack.c.l.bf16 %v87
    %v986 = vunpack.c.l.bf16 %v88
    %v987 = vunpack.c.l.bf16 %v89
    %v988 = vunpack.c.l.bf16 %v90
    %v989 = vunpack.c.l.bf16 %v91
    %v990 = vunpack.c.l.bf16 %v92
    %v991 = vunpack.c.l.bf16 %v93
    %v992 = vunpack.c.l.bf16 %v94
    %v993 = vunpack.c.l.bf16 %v95
    %v994 = vunpack.c.l.bf16 %v96
    %v995 = vunpack.c.l.bf16 %v97
    %v996 = vunpack.c.l.bf16 %v98
    %v997 = vunpack.c.l.bf16 %v99
    %v998 = vunpack.c.l.bf16 %v100
    %v999 = vunpack.c.l.bf16 %v101
    %v1000 = vunpack.c.l.bf16 %v102
    %v1001 = vunpack.c.l.bf16 %v103
    %v1002 = vunpack.c.l.bf16 %v104
    %v1003 = vunpack.c.l.bf16 %v105
    %v1004 = vunpack.c.l.bf16 %v106
    %v1005 = vunpack.c.l.bf16 %v107
    %v1006 = vunpack.c.l.bf16 %v108
    %v1007 = vadd.f32 %v943, %v975
    %v1008 = vadd.f32 %v944, %v976
    %v1009 = vadd.f32 %v945, %v977
    %v1010 = vadd.f32 %v946, %v978
    %v1011 = vadd.f32 %v947, %v979
    %v1012 = vadd.f32 %v948, %v980
    %v1013 = vadd.f32 %v949, %v981
    %v1014 = vadd.f32 %v950, %v982
    %v1015 = vadd.f32 %v951, %v983
    %v1016 = vadd.f32 %v952, %v984
    %v1017 = vadd.f32 %v953, %v985
    %v1018 = vadd.f32 %v954, %v986
    %v1019 = vadd.f32 %v955, %v987
    %v1020 = vadd.f32 %v956, %v988
    %v1021 = vadd.f32 %v957, %v989
    %v1022 = vadd.f32 %v958, %v990
    %v1023 = vadd.f32 %v959, %v991
    %v1024 = vadd.f32 %v960, %v992
    %v1025 = vadd.f32 %v961, %v993
    %v1026 = vadd.f32 %v962, %v994
    %v1027 = vadd.f32 %v963, %v995
    %v1028 = vadd.f32 %v964, %v996
    %v1029 = vadd.f32 %v965, %v997
    %v1030 = vadd.f32 %v966, %v998
    %v1031 = vadd.f32 %v967, %v999
    %v1032 = vadd.f32 %v968, %v1000
    %v1033 = vadd.f32 %v969, %v1001
    %v1034 = vadd.f32 %v970, %v1002
    %v1035 = vadd.f32 %v971, %v1003
    %v1036 = vadd.f32 %v972, %v1004
    %v1037 = vadd.f32 %v973, %v1005
    %v1038 = vadd.f32 %v974, %v1006
    %v1039 = vpack.c.bf16 %v1008, %v1007
    %v1040 = vpack.c.bf16 %v1010, %v1009
    %v1041 = vpack.c.bf16 %v1012, %v1011
    %v1042 = vpack.c.bf16 %v1014, %v1013
    %v1043 = vpack.c.bf16 %v1016, %v1015
    %v1044 = vpack.c.bf16 %v1018, %v1017
    %v1045 = vpack.c.bf16 %v1020, %v1019
    %v1046 = vpack.c.bf16 %v1022, %v1021
    %v1047 = vpack.c.bf16 %v1024, %v1023
    %v1048 = vpack.c.bf16 %v1026, %v1025
    %v1049 = vpack.c.bf16 %v1028, %v1027
    %v1050 = vpack.c.bf16 %v1030, %v1029
    %v1051 = vpack.c.bf16 %v1032, %v1031
    %v1052 = vpack.c.bf16 %v1034, %v1033
    %v1053 = vpack.c.bf16 %v1036, %v1035
    %v1054 = vpack.c.bf16 %v1038, %v1037
    %v1071 = vunpack.c.l.b16 %v1039
    %v1072 = vunpack.c.h.b16 %v1039
    %v1073 = vunpack.c.l.b16 %v1040
    %v1074 = vunpack.c.h.b16 %v1040
    %v1075 = vunpack.c.l.b16 %v1041
    %v1076 = vunpack.c.h.b16 %v1041
    %v1077 = vunpack.c.l.b16 %v1042
    %v1078 = vunpack.c.h.b16 %v1042
    %v1079 = vunpack.c.l.b16 %v1043
    %v1080 = vunpack.c.h.b16 %v1043
    %v1081 = vunpack.c.l.b16 %v1044
    %v1082 = vunpack.c.h.b16 %v1044
    %v1083 = vunpack.c.l.b16 %v1045
    %v1084 = vunpack.c.h.b16 %v1045
    %v1085 = vunpack.c.l.b16 %v1046
    %v1086 = vunpack.c.h.b16 %v1046
    %v1087 = vunpack.c.l.b16 %v1047
    %v1088 = vunpack.c.h.b16 %v1047
    %v1089 = vunpack.c.l.b16 %v1048
    %v1090 = vunpack.c.h.b16 %v1048
    %v1091 = vunpack.c.l.b16 %v1049
    %v1092 = vunpack.c.h.b16 %v1049
    %v1093 = vunpack.c.l.b16 %v1050
    %v1094 = vunpack.c.h.b16 %v1050
    %v1095 = vunpack.c.l.b16 %v1051
    %v1096 = vunpack.c.h.b16 %v1051
    %v1097 = vunpack.c.l.b16 %v1052
    %v1098 = vunpack.c.h.b16 %v1052
    %v1099 = vunpack.c.l.b16 %v1053
    %v1100 = vunpack.c.h.b16 %v1053
    %v1101 = vunpack.c.l.b16 %v1054
    %v1102 = vunpack.c.h.b16 %v1054
    %v1103 = vpack.c.b16 %v1071, %v1071
    %v1104 = vpack.c.b16 %v1072, %v1072
    %v1105 = vpack.c.b16 %v1073, %v1073
    %v1106 = vpack.c.b16 %v1074, %v1074
    %v1107 = vpack.c.b16 %v1075, %v1075
    %v1108 = vpack.c.b16 %v1076, %v1076
    %v1109 = vpack.c.b16 %v1077, %v1077
    %v1110 = vpack.c.b16 %v1078, %v1078
    %v1111 = vpack.c.b16 %v1079, %v1079
    %v1112 = vpack.c.b16 %v1080, %v1080
    %v1113 = vpack.c.b16 %v1081, %v1081
    %v1114 = vpack.c.b16 %v1082, %v1082
    %v1115 = vpack.c.b16 %v1083, %v1083
    %v1116 = vpack.c.b16 %v1084, %v1084
    %v1117 = vpack.c.b16 %v1085, %v1085
    %v1118 = vpack.c.b16 %v1086, %v1086
    %v1119 = vpack.c.b16 %v1087, %v1087
    %v1120 = vpack.c.b16 %v1088, %v1088
    %v1121 = vpack.c.b16 %v1089, %v1089
    %v1122 = vpack.c.b16 %v1090, %v1090
    %v1123 = vpack.c.b16 %v1091, %v1091
    %v1124 = vpack.c.b16 %v1092, %v1092
    %v1125 = vpack.c.b16 %v1093, %v1093
    %v1126 = vpack.c.b16 %v1094, %v1094
    %v1127 = vpack.c.b16 %v1095, %v1095
    %v1128 = vpack.c.b16 %v1096, %v1096
    %v1129 = vpack.c.b16 %v1097, %v1097
    %v1130 = vpack.c.b16 %v1098, %v1098
    %v1131 = vpack.c.b16 %v1099, %v1099
    %v1132 = vpack.c.b16 %v1100, %v1100
    %v1133 = vpack.c.b16 %v1101, %v1101
    %v1134 = vpack.c.b16 %v1102, %v1102
    %1167 = vst [vmem:[#allocation10] sm:$0xf] %v1103
    %1168 = vst [vmem:[#allocation10 + $0x4] sm:$0xf] %v1104
    %1169 = vst [vmem:[#allocation10 + $0x8] sm:$0xf] %v1105
    %1170 = vst [vmem:[#allocation10 + $0xc] sm:$0xf] %v1106
    %1171 = vst [vmem:[#allocation10 + $0x10] sm:$0xf] %v1107
    %1172 = vst [vmem:[#allocation10 + $0x14] sm:$0xf] %v1108
    %1173 = vst [vmem:[#allocation10 + $0x18] sm:$0xf] %v1109
    %1174 = vst [vmem:[#allocation10 + $0x1c] sm:$0xf] %v1110
    %1175 = vst [vmem:[#allocation10 + $0x20] sm:$0xf] %v1111
    %1176 = vst [vmem:[#allocation10 + $0x24] sm:$0xf] %v1112
    %1177 = vst [vmem:[#allocation10 + $0x28] sm:$0xf] %v1113
    %1178 = vst [vmem:[#allocation10 + $0x2c] sm:$0xf] %v1114
    %1179 = vst [vmem:[#allocation10 + $0x30] sm:$0xf] %v1115
    %1180 = vst [vmem:[#allocation10 + $0x34] sm:$0xf] %v1116
    %1181 = vst [vmem:[#allocation10 + $0x38] sm:$0xf] %v1117
    %1182 = vst [vmem:[#allocation10 + $0x3c] sm:$0xf] %v1118
    %1183 = vst [vmem:[#allocation10 + $0x40] sm:$0xf] %v1119
    %1184 = vst [vmem:[#allocation10 + $0x44] sm:$0xf] %v1120
    %1185 = vst [vmem:[#allocation10 + $0x48] sm:$0xf] %v1121
    %1186 = vst [vmem:[#allocation10 + $0x4c] sm:$0xf] %v1122
    %1187 = vst [vmem:[#allocation10 + $0x50] sm:$0xf] %v1123
    %1188 = vst [vmem:[#allocation10 + $0x54] sm:$0xf] %v1124
    %1189 = vst [vmem:[#allocation10 + $0x58] sm:$0xf] %v1125
    %1190 = vst [vmem:[#allocation10 + $0x5c] sm:$0xf] %v1126
    %1191 = vst [vmem:[#allocation10 + $0x60] sm:$0xf] %v1127
    %1192 = vst [vmem:[#allocation10 + $0x64] sm:$0xf] %v1128
    %1193 = vst [vmem:[#allocation10 + $0x68] sm:$0xf] %v1129
    %1194 = vst [vmem:[#allocation10 + $0x6c] sm:$0xf] %v1130
    %1195 = vst [vmem:[#allocation10 + $0x70] sm:$0xf] %v1131
    %1196 = vst [vmem:[#allocation10 + $0x74] sm:$0xf] %v1132
    %1197 = vst [vmem:[#allocation10 + $0x78] sm:$0xf] %v1133
    %1198 = vst [vmem:[#allocation10 + $0x7c] sm:$0xf] %v1134
    // Predicated region
    $region38: #{tpu_custom_call.1} parent=1 // pred_check
      _
    $region39: #{tpu_custom_call.1} parent=1 // pred_check_branch
      %1200 = sbr.rel (0) target = $region41
    $region40: #{tpu_custom_call.1} parent=1 // pred_region
      %s1202 = ssub.s32 2048, 2048
      %1203 = vsyncadd [#allocation4], %s1202
      %s1204 = sshll.u32 [#allocation10], 4
      %s1205 = int_to_ptr.vmem [resolvable:$true] %s1204
      %1210 = dma.vmem_to_hbm [thread:$0]  %s1205, 2048, %s5, [#allocation4], 64, 64, 4
    $region41: #{tpu_custom_call.1} parent=1 // pred_fallthru
      _
    // Predicated region
    $region42: #{tpu_custom_call.1} parent=1 // pred_check
      _
    $region43: #{tpu_custom_call.1} parent=1 // pred_check_branch
      %1212 = sbr.rel (0) target = $region45
    $region44: #{tpu_custom_call.1} parent=1 // pred_region
      %1213 = dma.done [#allocation4], 2048
    $region45: #{tpu_custom_call.1} parent=1 // pred_fallthru
      _
    %1214 = vsyncpa [#allocation3], 1
    %1215 = vsyncpa [#allocation6], 1
    %1216 = vsyncpa [#allocation9], 1
    %1217 = vsyncpa [#allocation4], 1

</llo_original>
